<compile_context>
chip_gen: v7x
topology: tpu7x:2x2x1
jax: 0.10.0
libtpu: 0.0.40
codegen_flags: <defaults>
</compile_context>

<pallas_src>
import functools

import jax
import jax.numpy as jnp
from jax.experimental import pallas as pl
from jax.experimental.pallas import tpu as pltpu


def _round_up(x: int, m: int) -> int:
    return ((x + m - 1) // m) * m


def _clustering_kernel(x_ref, ct_ref, cc_ref, o_ref, *,
                       inv_alpha: float, power: float, k_valid: int):
    """One row tile: t = 1 + ||x-c||^2/alpha via MXU cross-term, t-kernel, row-normalize."""
    x = x_ref[...].astype(jnp.float32)                               # (TN, D)

    # ||x||^2 / alpha  (per-row scalar column)
    xx = jnp.sum(x * x, axis=-1, keepdims=True)                      # (TN, 1)
    if inv_alpha != 1.0:
        xx = xx * inv_alpha

    # Cross term on the MXU; ct' already carries the (-2/alpha) factor.
    xc = jnp.dot(x, ct_ref[...], preferred_element_type=jnp.float32)  # (TN, K_pad)

    # t = 1 + dist.  cc' = 1 + ||c||^2/alpha (padded cluster columns poisoned to 1e30).
    t = xx + xc + cc_ref[...]                                         # (TN, K_pad)
    t = jnp.maximum(t, 1.0)                                           # guard cancellation

    # q = t ** power, specialized for common rational powers (single EUP slot).
    if power == -1.0:
        q = pl.reciprocal(t)
    elif power == -0.5:
        q = jax.lax.rsqrt(t)
    elif power == -1.5:
        q = jax.lax.rsqrt(t) * pl.reciprocal(t)
    elif power == -2.0:
        r = pl.reciprocal(t)
        q = r * r
    else:
        q = t ** power                                                # generic: exp+log

    # Row-normalize.  Poisoned pad columns contribute ~1e-30 -> negligible in the sum.
    rowsum = jnp.sum(q, axis=-1, keepdims=True)                       # (TN, 1)
    q = q * pl.reciprocal(rowsum)

    # Store only the K valid cluster columns (masked lane store; store slot has slack).
    o_ref[...] = q[:, :k_valid].astype(o_ref.dtype)


def prepare_clusters(clusters: jax.Array, alpha: float = 1.0):
    """Fold constants into resident operands.  Hoist/cache this if clusters are reused.

    Returns:
      ct: (D, K_pad) f32 = (-2/alpha) * clusters^T, zero-padded to 128 lanes.
      cc: (1, K_pad) f32 = 1 + ||c||^2/alpha for valid columns, 1e30 poison for pads.
    """
    K, D = clusters.shape
    K_pad = _round_up(K, 128)
    c = clusters.astype(jnp.float32)
    ct = jnp.zeros((D, K_pad), jnp.float32).at[:, :K].set((-2.0 / alpha) * c.T)
    cc_valid = 1.0 + jnp.sum(c * c, axis=-1) / alpha                  # (K,)
    cc = jnp.full((1, K_pad), 1e30, jnp.float32).at[0, :K].set(cc_valid)
    return ct, cc


def clustering_layer(x: jax.Array, clusters: jax.Array, alpha: float = 1.0,
                     block_rows: int = 4096, prepared=None) -> jax.Array:
    """Pallas wrapper. x: (N, D), clusters: (K, D) -> (N, K) soft assignments."""
    N, D = x.shape
    K, D2 = clusters.shape
    assert D == D2, "feature dims must match"

    ct, cc = prepare_clusters(clusters, alpha) if prepared is None else prepared
    K_pad = ct.shape[1]

    # Row tile: ~8 grid steps when N is large (pipelining + v7x dual-TC sharding),
    # capped by block_rows, always 8-sublane aligned.
    TN = min(block_rows, max(8, _round_up(pl.cdiv(N, 8), 8)), _round_up(N, 8))
    grid = (pl.cdiv(N, TN),)

    kernel = functools.partial(
        _clustering_kernel,
        inv_alpha=1.0 / alpha,
        power=-(alpha + 1.0) / 2.0,
        k_valid=K,
    )

    return pl.pallas_call(
        kernel,
        out_shape=jax.ShapeDtypeStruct((N, K), x.dtype),
        grid=grid,
        in_specs=[
            pl.BlockSpec((TN, D), lambda i: (i, 0)),        # x row tile (pipelined)
            pl.BlockSpec((D, K_pad), lambda i: (0, 0)),     # (-2/alpha) c^T (resident)
            pl.BlockSpec((1, K_pad), lambda i: (0, 0)),     # 1 + ||c||^2/alpha (resident)
        ],
        out_specs=pl.BlockSpec((TN, K), lambda i: (i, 0)),  # unpadded (N, K) output
        compiler_params=pltpu.CompilerParams(dimension_semantics=("parallel",)),
    )(x.astype(jnp.float32), ct, cc)


def _reference(x, clusters, alpha=1.0):
    """Pure-JAX reference mirroring the PyTorch forward exactly (broadcast form)."""
    diff = x[:, None, :] - clusters[None, :, :]
    dist = jnp.sum(diff * diff, axis=2) / alpha
    power = -(alpha + 1.0) / 2.0
    q = (1.0 + dist) ** power
    return q / jnp.sum(q, axis=1, keepdims=True)


if __name__ == "__main__":
    # Module config: dims[-1] = 32 features, n_clusters = 100, alpha = 1.0.
    N, D, K = 8, 32, 100
    alpha = 1.0

    key = jax.random.PRNGKey(0)
    kx, kc = jax.random.split(key)

    x = jax.random.normal(kx, (N, D), dtype=jnp.float32)

    # nn.init.xavier_normal_ on a (n_clusters, dims[-1]) tensor:
    # std = sqrt(2 / (fan_in + fan_out)) = sqrt(2 / (K + D))
    xavier_std = (2.0 / (K + D)) ** 0.5
    clusters = xavier_std * jax.random.normal(kc, (K, D), dtype=jnp.float32)

    fn = jax.jit(functools.partial(clustering_layer, alpha=alpha))
    out = jax.block_until_ready(fn(x, clusters))

    ref = _reference(x, clusters, alpha=alpha)
    assert out.shape == (N, K)
    assert jnp.allclose(out, ref, atol=1e-5, rtol=1e-5), "mismatch vs reference"
    assert jnp.allclose(jnp.sum(out, axis=1), 1.0, atol=1e-5), "rows must sum to 1"

    print("KERNEL_OK")
</pallas_src>

<mosaic_0001>
module attributes {stable_mosaic.version = 11 : i64} {
  func.func @_clustering_kernel(%arg0: i32, %arg1: memref<8x32xf32, #tpu.memory_space<vmem>>, %arg2: memref<32x128xf32, #tpu.memory_space<vmem>>, %arg3: memref<1x128xf32, #tpu.memory_space<vmem>>, %arg4: memref<8x100xf32, #tpu.memory_space<vmem>>) attributes {dimension_semantics = [#tpu.dimension_semantics<parallel>], iteration_bounds = array<i64: 1>, scalar_prefetch = 0 : i64, scratch_operands = 0 : i64, tpu.core_type = #tpu.core_type<tc>, window_params = [{transform_indices = @transform_0, window_bounds = array<i64: 8, 32>}, {pipeline_mode = #tpu.pipeline_mode<synchronous>, transform_indices = @transform_1, window_bounds = array<i64: 32, 128>}, {pipeline_mode = #tpu.pipeline_mode<synchronous>, transform_indices = @transform_2, window_bounds = array<i64: 1, 128>}, {transform_indices = @transform_3, window_bounds = array<i64: 8, 100>}]} {
    %c0 = arith.constant 0 : index
    %c0_0 = arith.constant 0 : index
    %0 = vector.load %arg1[%c0, %c0_0] : memref<8x32xf32, #tpu.memory_space<vmem>>, vector<8x32xf32>
    %1 = arith.mulf %0, %0 : vector<8x32xf32>
    %cst = arith.constant dense<0.000000e+00> : vector<8xf32>
    %2 = vector.multi_reduction <add>, %1, %cst [1] : vector<8x32xf32> to vector<8xf32>
    %3 = vector.shape_cast %2 : vector<8xf32> to vector<8x1xf32>
    %c0_1 = arith.constant 0 : index
    %c0_2 = arith.constant 0 : index
    %4 = vector.load %arg2[%c0_1, %c0_2] : memref<32x128xf32, #tpu.memory_space<vmem>>, vector<32x128xf32>
    %cst_3 = arith.constant dense<0.000000e+00> : vector<8x128xf32>
    %5 = tpu.matmul %0, %4, %cst_3 {dimension_numbers = #tpu.dot_dimension_numbers<[1], [0], [0], [1], [0, 0, 1, 1], [], []>} : vector<8x32xf32>, vector<32x128xf32>, vector<8x128xf32> -> vector<8x128xf32>
    %6 = vector.broadcast %3 : vector<8x1xf32> to vector<8x128xf32>
    %7 = arith.addf %6, %5 : vector<8x128xf32>
    %c0_4 = arith.constant 0 : index
    %c0_5 = arith.constant 0 : index
    %8 = vector.load %arg3[%c0_4, %c0_5] : memref<1x128xf32, #tpu.memory_space<vmem>>, vector<1x128xf32>
    %9 = vector.broadcast %8 : vector<1x128xf32> to vector<8x128xf32>
    %10 = arith.addf %7, %9 : vector<8x128xf32>
    %cst_6 = arith.constant 1.000000e+00 : f32
    %11 = vector.broadcast %cst_6 : f32 to vector<8x128xf32>
    %12 = arith.maximumf %10, %11 : vector<8x128xf32>
    %13 = tpu.reciprocal %12 : vector<8x128xf32> -> vector<8x128xf32>
    %cst_7 = arith.constant dense<0.000000e+00> : vector<8xf32>
    %14 = vector.multi_reduction <add>, %13, %cst_7 [1] : vector<8x128xf32> to vector<8xf32>
    %15 = vector.shape_cast %14 : vector<8xf32> to vector<8x1xf32>
    %16 = tpu.reciprocal %15 : vector<8x1xf32> -> vector<8x1xf32>
    %17 = vector.broadcast %16 : vector<8x1xf32> to vector<8x128xf32>
    %18 = arith.mulf %13, %17 : vector<8x128xf32>
    %19 = vector.extract_strided_slice %18 {offsets = [0, 0], sizes = [8, 100], strides = [1, 1]} : vector<8x128xf32> to vector<8x100xf32>
    %c0_8 = arith.constant 0 : index
    %c0_9 = arith.constant 0 : index
    %20 = vector.load %arg4[%c0_8, %c0_9] : memref<8x100xf32, #tpu.memory_space<vmem>>, vector<8x100xf32>
    tpu.vector_store %arg4[%c0_8, %c0_9], %19 {strides = array<i32>} : memref<8x100xf32, #tpu.memory_space<vmem>>, vector<8x100xf32>,
    return
  }
  func.func @transform_0(%arg0: i32) -> (i32, i32) {
    %c0_i32 = arith.constant 0 : i32
    %c0_i32_0 = arith.constant 0 : i32
    return %arg0, %c0_i32 : i32, i32
  }
  func.func @transform_1(%arg0: i32) -> (i32, i32) {
    %c0_i32 = arith.constant 0 : i32
    %c0_i32_0 = arith.constant 0 : i32
    %c0_i32_1 = arith.constant 0 : i32
    return %c0_i32, %c0_i32_0 : i32, i32
  }
  func.func @transform_2(%arg0: i32) -> (i32, i32) {
    %c0_i32 = arith.constant 0 : i32
    %c0_i32_0 = arith.constant 0 : i32
    %c0_i32_1 = arith.constant 0 : i32
    return %c0_i32, %c0_i32_0 : i32, i32
  }
  func.func @transform_3(%arg0: i32) -> (i32, i32) {
    %c0_i32 = arith.constant 0 : i32
    %c0_i32_0 = arith.constant 0 : i32
    return %arg0, %c0_i32 : i32, i32
  }
}

</mosaic_0001>

<llo_original>
// kernel: clustering_layer.1
$region0: #{clustering_layer.1}
  #allocation0 [shape = 'u32[]', space=smem, size = 0x4, offset = 0x4, fixed_abs, tag = 'smem constant byte address 0x4 - core index']
  #allocation1 [shape = 'u32[144,128]{1,0:T(1,128)}', space=vmem, size = 0x12000, scoped, tag = 'internal scratch']
  %s0 = inlined_call_operand.vmem [shape: f32[8,32], index: 0, kind: input, shape index: {}]
  %s1 = inlined_call_operand.vmem [shape: f32[32,128], index: 1, kind: input, shape index: {}]
  %s2 = inlined_call_operand.vmem [shape: f32[1,128], index: 2, kind: input, shape index: {}]
  %s3 = inlined_call_operand.hbm [shape: f32[8,100], index: 3, kind: output, shape index: {}]
  %s4 = sld [smem:[#allocation0]]
  $region22: #{clustering_layer.1} parent=0
    _
  %s6 = ssub.s32 1, %s4
  %s7 = scalar_select 0, %s6, %s4
  $region1: #{clustering_layer.1} parent=0
    #allocation2 [shape = 'u8[4096]{0}', space=vmem, size = 0x1000, scoped, tag = 'output window, operand 0, single buffered']
    #allocation3 [shape = 's32[1]{0}', space=sflag, size = 0x4, scoped, tag = 'scoped memory for clustering_layer.1']
    %8 = vsyncpa [#allocation3], 0
    // Predicated region
    $region2: #{clustering_layer.1} parent=1 // pred_check
      _
    $region3: #{clustering_layer.1} parent=1 // pred_check_branch
      %10 = sbr.rel (0) target = $region5
    $region4: #{clustering_layer.1} parent=1 // pred_region
      _
    $region5: #{clustering_layer.1} parent=1 // pred_fallthru
      _
    // Predicated region
    $region6: #{clustering_layer.1} parent=1 // pred_check
      _
    $region7: #{clustering_layer.1} parent=1 // pred_check_branch
      %12 = sbr.rel (0) target = $region9
    $region8: #{clustering_layer.1} parent=1 // pred_region
      _
    $region9: #{clustering_layer.1} parent=1 // pred_fallthru
      _
    // Predicated region
    $region10: #{clustering_layer.1} parent=1 // pred_check
      _
    $region11: #{clustering_layer.1} parent=1 // pred_check_branch
      %14 = sbr.rel (0) target = $region13
    $region12: #{clustering_layer.1} parent=1 // pred_region
      _
    $region13: #{clustering_layer.1} parent=1 // pred_fallthru
      _
    %v15 = vld [vmem:[%s0] sm:$0xff]
    %v16 = vmul.f32 %v15, %v15
    %vm17 = vcmask 261120
    %v18 = vsel %vm17, %v16, 0.0
    %19 = vadd.xlane.f32.xlu0 %v18
    %v20 = vpop.xlane.xlu0 %19
    %v21 = vld [vmem:[%s1] sm:$0xff]
    %v22 = vld [vmem:[%s1 + $0x8] sm:$0xff]
    %v23 = vld [vmem:[%s1 + $0x10] sm:$0xff]
    %v24 = vld [vmem:[%s1 + $0x18] sm:$0xff]
    %v26 = vsel %vm17, %v15, 0
    %28 = vmatprep.subr.mxu0 0.0
    %29 = vmatpush1.msra.mxu0 %v21
    %30 = vmatprep.subr.mxu0 0.0
    %31 = vmatpush1.msra.mxu0 %v22
    %32 = vmatprep.subr.mxu0 0.0
    %33 = vmatpush1.msra.mxu0 %v23
    %34 = vmatprep.subr.mxu0 0.0
    %35 = vmatpush1.msra.mxu0 %v24
    %36 = vmatprep.subr.mxu0 0.0
    %37 = vmatpush1.msra.mxu0 0.0
    %38 = vmatprep.subr.mxu0 0.0
    %39 = vmatpush1.msra.mxu0 0.0
    %40 = vmatprep.subr.mxu0 0.0
    %41 = vmatpush1.msra.mxu0 0.0
    %42 = vmatprep.subr.mxu0 0.0
    %43 = vmatpush1.msra.mxu0 0.0
    %44 = vmatprep.subr.mxu0 0.0
    %45 = vmatpush1.msra.mxu0 0.0
    %46 = vmatprep.subr.mxu0 0.0
    %47 = vmatpush1.msra.mxu0 0.0
    %48 = vmatprep.subr.mxu0 0.0
    %49 = vmatpush1.msra.mxu0 0.0
    %50 = vmatprep.subr.mxu0 0.0
    %51 = vmatpush1.msra.mxu0 0.0
    %52 = vmatprep.subr.mxu0 0.0
    %53 = vmatpush1.msra.mxu0 0.0
    %54 = vmatprep.subr.mxu0 0.0
    %55 = vmatpush1.msra.mxu0 0.0
    %56 = vmatprep.subr.mxu0 0.0
    %57 = vmatpush1.msra.mxu0 0.0
    %58 = vmatprep.subr.mxu0 0.0
    %59 = vmatpush1.msra.mxu0 0.0
    %60 = vmatprep.subr.mxu0 0.0
    %61 = vmatpush1.msra.mxu0 0.0
    %62 = vmatprep.subr.mxu0 0.0
    %63 = vmatpush1.msra.mxu0 0.0
    %64 = vmatprep.subr.mxu0 0.0
    %65 = vmatpush1.msra.mxu0 0.0
    %66 = vmatprep.subr.mxu0 0.0
    %67 = vmatpush1.msra.mxu0 0.0
    %68 = vmatprep.subr.mxu0 0.0
    %69 = vmatpush1.msra.mxu0 0.0
    %70 = vmatprep.subr.mxu0 0.0
    %71 = vmatpush1.msra.mxu0 0.0
    %72 = vmatprep.subr.mxu0 0.0
    %73 = vmatpush1.msra.mxu0 0.0
    %74 = vmatprep.subr.mxu0 0.0
    %75 = vmatpush1.msra.mxu0 0.0
    %76 = vmatprep.subr.mxu0 0.0
    %77 = vmatpush1.msra.mxu0 0.0
    %78 = vmatprep.subr.mxu0 0.0
    %79 = vmatpush1.msra.mxu0 0.0
    %80 = vmatprep.subr.mxu0 0.0
    %81 = vmatpush1.msra.mxu0 0.0
    %82 = vmatprep.subr.mxu0 0.0
    %83 = vmatpush1.msra.mxu0 0.0
    %84 = vmatprep.subr.mxu0 0.0
    %85 = vmatpush1.msra.mxu0 0.0
    %86 = vmatprep.subr.mxu0 0.0
    %87 = vmatpush1.msra.mxu0 0.0
    %88 = vmatprep.subr.mxu0 0.0
    %89 = vmatpush1.msra.mxu0 0.0
    %90 = vmatprep.subr.mxu0 0.0
    %91 = vmatpush1.msra.mxu0 0.0
    %92 = vmatprep.mubr.f32.mxu0 0.0
    %93 = vmatmul.mubr.f32.gmra.mrb[0].mxu0 %v26
    %v94 = vpop.f32.mrb[0].mxu0
    %v95 = vadd.f32 0.0, %v94
    %v96 = vpop.f32.mrb[0].mxu0
    %97 = vdwg.mxu0
    %v98 = vadd.f32 %v20, %v95
    %v99 = vld [vmem:[%s2] sm:$0x1]
    %v101 = vlaneseq
    %v102 = vshrl.u32 %v101, 7
    %v103 = vsub.s32 0, %v102
    %v104 = vrot.slane %v99, %v103
    %v106 = vadd.f32 %v98, %v104
    %v107 = vmax.f32 %v106, 1.0
    %v108 = vrcp.pop %v107
    %109 = vadd.xlane.f32.xlu0 %v108
    %v110 = vpop.xlane.xlu0 %109
    %v111 = vrcp.pop %v110
    %v112 = vmul.f32 %v108, %v111
    %vm113 = vcmask 818176
    %114 = vst.msk [vmem:[#allocation2] sm:$0xff] %vm113, %v112
    // Predicated region
    $region14: #{clustering_layer.1} parent=1 // pred_check
      _
    $region15: #{clustering_layer.1} parent=1 // pred_check_branch
      %116 = sbr.rel (0) target = $region17
    $region16: #{clustering_layer.1} parent=1 // pred_region
      %s118 = ssub.s32 128, 128
      %119 = vsyncadd [#allocation3], %s118
      %s121 = sshll.u32 [#allocation2], 4
      %s122 = int_to_ptr.vmem [resolvable:$true] %s121
      %124 = dma.vmem_to_hbm [thread:$0]  %s122, 128, %s3, [#allocation3]
    $region17: #{clustering_layer.1} parent=1 // pred_fallthru
      _
    // Predicated region
    $region18: #{clustering_layer.1} parent=1 // pred_check
      _
    $region19: #{clustering_layer.1} parent=1 // pred_check_branch
      %126 = sbr.rel (0) target = $region21
    $region20: #{clustering_layer.1} parent=1 // pred_region
      %127 = dma.done [#allocation3], 128
    $region21: #{clustering_layer.1} parent=1 // pred_fallthru
      _
    %128 = vsyncpa [#allocation3], 1

</llo_original>
